<compile_context>
chip_gen: v7x
topology: tpu7x:2x2x1
jax: 0.10.0
libtpu: 0.0.40
codegen_flags: <defaults>
</compile_context>

<pallas_src>
import functools

import jax
import jax.numpy as jnp
from jax import lax
from jax.experimental import pallas as pl
from jax.experimental.pallas import tpu as pltpu

_VMEM_LIMIT = 48 * 1024 * 1024  # raise scoped VMEM (defaults 16/32 MiB); stays < v7x 64 MiB


def _layernorm(x, g, b, eps=1e-6):
    # x: (T, E) f32, g/b: (1, E); biased variance, matches torch.nn.LayerNorm(eps=1e-6)
    mu = jnp.mean(x, axis=-1, keepdims=True)
    xc = x - mu
    var = jnp.mean(xc * xc, axis=-1, keepdims=True)
    return xc * lax.rsqrt(var + eps) * g + b


def _tile(n, target):
    """Largest tile <= target that divides n and is sublane-aligned (or n itself)."""
    if n <= target:
        return n
    for t in range(target, 7, -1):
        if n % t == 0 and t % 8 == 0:
            return t
    return n


# ----------------------------------------------------------------------------
# Kernel 1: ln1 + fused QKV projection
# ----------------------------------------------------------------------------
def ln_qkv_kernel(x_ref, g_ref, b_ref, wqkv_ref, bqkv_ref,
                  q_ref, k_ref, v_ref, *, heads):
    x = x_ref[0].astype(jnp.float32)                       # (TS, E)
    E = x.shape[-1]
    D = E // heads
    xn = _layernorm(x, g_ref[...], b_ref[...])             # f32 stats
    qkv = jnp.dot(xn.astype(jnp.bfloat16), wqkv_ref[...],  # bf16 MXU, f32 accumulate
                  preferred_element_type=jnp.float32) + bqkv_ref[...]
    scale = 1.0 / (float(D) ** 0.5)
    q_ref[0] = (qkv[:, :E] * scale).astype(q_ref.dtype)
    k_ref[0] = qkv[:, E:2 * E].astype(k_ref.dtype)
    v_ref[0] = qkv[:, 2 * E:].astype(v_ref.dtype)


# ----------------------------------------------------------------------------
# Kernel 2: flash attention (online softmax over KV tiles) + out-proj +
#           residual + ln2 + mlp + residual
# ----------------------------------------------------------------------------
def flash_mlp_kernel(xin_ref, q_ref, k_ref, v_ref, wout_ref, bout_ref,
                     ln2g_ref, ln2b_ref, wmlp_ref, bmlp_ref, out_ref,
                     m_sc, l_sc, acc_sc, *, heads):
    ki = pl.program_id(2)

    @pl.when(ki == 0)
    def _init():
        m_sc[...] = jnp.full(m_sc.shape, -jnp.inf, m_sc.dtype)
        l_sc[...] = jnp.zeros(l_sc.shape, l_sc.dtype)
        acc_sc[...] = jnp.zeros(acc_sc.shape, acc_sc.dtype)

    q = q_ref[0]                        # (TQ, E) bf16, already scaled by 1/sqrt(D)
    k = k_ref[0]                        # (TK, E) bf16
    v = v_ref[0]                        # (TK, E) bf16
    E = q.shape[-1]
    D = E // heads

    # Online softmax per head; only (TQ, TK) tiles are ever materialized.
    for h in range(heads):
        qh = q[:, h * D:(h + 1) * D]
        kh = k[:, h * D:(h + 1) * D]
        vh = v[:, h * D:(h + 1) * D]
        # Contract the last axes of both operands -> no explicit kh.T transpose.
        s = lax.dot_general(qh, kh, (((1,), (1,)), ((), ())),
                            preferred_element_type=jnp.float32)        # (TQ, TK) f32
        m_prev = m_sc[h]                                               # (TQ, 1)
        m_new = jnp.maximum(m_prev, jnp.max(s, axis=-1, keepdims=True))
        alpha = jnp.exp(m_prev - m_new)
        p = jnp.exp(s - m_new)                                         # f32
        l_sc[h] = alpha * l_sc[h] + jnp.sum(p, axis=-1, keepdims=True)
        acc_sc[h] = alpha * acc_sc[h] + jnp.dot(
            p.astype(jnp.bfloat16), vh, preferred_element_type=jnp.float32)
        m_sc[h] = m_new

    @pl.when(ki == pl.num_programs(2) - 1)
    def _finalize():
        x_in = xin_ref[0].astype(jnp.float32)                          # (TQ, E)
        # Output projection folded per head:
        #   sum_h (softmax_h @ V_h) @ W_out[h*D:(h+1)*D, :]  -- no concat needed.
        o = bout_ref[...]                                              # (1, E) f32
        for h in range(heads):
            inv_l = pl.reciprocal(l_sc[h], approx=True)                # EUP slot
            attn_h = (acc_sc[h] * inv_l).astype(jnp.bfloat16)          # (TQ, D)
            o = o + jnp.dot(attn_h, wout_ref[h],
                            preferred_element_type=jnp.float32)
        xr = o + x_in                                                  # residual 1
        y = _layernorm(xr, ln2g_ref[...], ln2b_ref[...])
        y = jnp.dot(y.astype(jnp.bfloat16), wmlp_ref[...],
                    preferred_element_type=jnp.float32) + bmlp_ref[...]
        out_ref[0] = (xr + y).astype(out_ref.dtype)                    # residual 2


# ----------------------------------------------------------------------------
# Wrapper
# ----------------------------------------------------------------------------
def self_attention_block(x, params, heads):
    """x: (B, S, E) float32. Implements the q_in=None forward path."""
    # TODO(synk): q_in cross-attention branch (ln1(q) concatenated with ln1(x)) not implemented.
    B, S, E = x.shape
    M = params["w_mlp"].shape[1]
    assert M == E, "residual `x + y` in the reference requires mlp_dim == embed_dim"
    assert E % heads == 0, "embed_dim must be divisible by heads"
    D = E // heads

    TS = _tile(S, 512)          # ln1 + QKV projection row tile
    TQ = _tile(S, 256)          # query tile
    TK = _tile(S, 512)          # key/value tile
    nS, nQ, nK = S // TS, S // TQ, S // TK

    # bf16 weights for the MXU (2x throughput, half the HBM->VMEM bytes);
    # biases and LayerNorm params stay f32.
    w_qkv = params["w_qkv"].astype(jnp.bfloat16)
    w_out = params["w_out"].astype(jnp.bfloat16).reshape(heads, D, E)   # per-head slabs
    w_mlp = params["w_mlp"].astype(jnp.bfloat16)

    # ---- Kernel 1: ln1 + fused QKV projection -> q (scaled), k, v in bf16 ----
    ce1 = pl.CostEstimate(
        flops=2 * B * S * E * 3 * E,
        transcendentals=B * S,
        bytes_accessed=4 * B * S * E + 3 * 2 * B * S * E + 2 * E * 3 * E + 16 * E)
    q, k, v = pl.pallas_call(
        functools.partial(ln_qkv_kernel, heads=heads),
        out_shape=tuple(jax.ShapeDtypeStruct((B, S, E), jnp.bfloat16) for _ in range(3)),
        grid=(B, nS),
        in_specs=[
            pl.BlockSpec((1, TS, E), lambda b, s: (b, s, 0)),      # x
            pl.BlockSpec((1, E), lambda b, s: (0, 0)),             # ln1 gamma
            pl.BlockSpec((1, E), lambda b, s: (0, 0)),             # ln1 beta
            pl.BlockSpec((E, 3 * E), lambda b, s: (0, 0)),         # W_qkv (bf16)
            pl.BlockSpec((1, 3 * E), lambda b, s: (0, 0)),         # b_qkv
        ],
        out_specs=tuple(pl.BlockSpec((1, TS, E), lambda b, s: (b, s, 0)) for _ in range(3)),
        compiler_params=pltpu.CompilerParams(
            dimension_semantics=("parallel", "parallel"),
            vmem_limit_bytes=_VMEM_LIMIT),
        cost_estimate=ce1,
    )(x, params["ln1_g"], params["ln1_b"], w_qkv, params["b_qkv"])

    # ---- Kernel 2: flash attention + out-proj + residual + ln2 + mlp + residual ----
    ce2 = pl.CostEstimate(
        flops=4 * B * S * S * E + 2 * B * S * E * E + 2 * B * S * E * M,
        transcendentals=B * heads * S * S + 2 * B * S,
        bytes_accessed=2 * 4 * B * S * E + 3 * 2 * B * S * E + 2 * (E * E + E * M) + 16 * E)
    out = pl.pallas_call(
        functools.partial(flash_mlp_kernel, heads=heads),
        out_shape=jax.ShapeDtypeStruct((B, S, E), jnp.float32),
        grid=(B, nQ, nK),
        in_specs=[
            pl.BlockSpec((1, TQ, E), lambda b, qi, ki: (b, qi, 0)),    # x_in (residual)
            pl.BlockSpec((1, TQ, E), lambda b, qi, ki: (b, qi, 0)),    # q (bf16)
            pl.BlockSpec((1, TK, E), lambda b, qi, ki: (b, ki, 0)),    # k (bf16)
            pl.BlockSpec((1, TK, E), lambda b, qi, ki: (b, ki, 0)),    # v (bf16)
            pl.BlockSpec((heads, D, E), lambda b, qi, ki: (0, 0, 0)),  # W_out per-head (bf16)
            pl.BlockSpec((1, E), lambda b, qi, ki: (0, 0)),            # b_out
            pl.BlockSpec((1, E), lambda b, qi, ki: (0, 0)),            # ln2 gamma
            pl.BlockSpec((1, E), lambda b, qi, ki: (0, 0)),            # ln2 beta
            pl.BlockSpec((E, M), lambda b, qi, ki: (0, 0)),            # W_mlp (bf16)
            pl.BlockSpec((1, M), lambda b, qi, ki: (0, 0)),            # b_mlp
        ],
        out_specs=pl.BlockSpec((1, TQ, E), lambda b, qi, ki: (b, qi, 0)),
        scratch_shapes=[
            pltpu.VMEM((heads, TQ, 1), jnp.float32),   # running max
            pltpu.VMEM((heads, TQ, 1), jnp.float32),   # running denominator
            pltpu.VMEM((heads, TQ, D), jnp.float32),   # running numerator
        ],
        compiler_params=pltpu.CompilerParams(
            dimension_semantics=("parallel", "parallel", "arbitrary"),
            vmem_limit_bytes=_VMEM_LIMIT),
        cost_estimate=ce2,
    )(x, q, k, v, w_out, params["b_out"], params["ln2_g"], params["ln2_b"],
      w_mlp, params["b_mlp"])
    return out


# ----------------------------------------------------------------------------
# Parameters + pure-JAX reference (mirrors the PyTorch forward, q_in=None path)
# ----------------------------------------------------------------------------
def make_params(key, embed_dim, mlp_dim):
    ks = jax.random.split(key, 6)
    E, M = embed_dim, mlp_dim
    return {
        "ln1_g": 1.0 + 0.05 * jax.random.normal(ks[0], (1, E), jnp.float32),
        "ln1_b": 0.05 * jax.random.normal(ks[1], (1, E), jnp.float32),
        "ln2_g": 1.0 + 0.05 * jax.random.normal(ks[2], (1, E), jnp.float32),
        "ln2_b": 0.05 * jax.random.normal(ks[3], (1, E), jnp.float32),
        # in_proj: PyTorch stores (3E, E); we store transposed (E, 3E).
        "w_qkv": 0.1 * jax.random.normal(ks[4], (E, 3 * E), jnp.float32),
        "b_qkv": 0.02 * jax.random.normal(ks[5], (1, 3 * E), jnp.float32),
        "w_out": 0.1 * jax.random.normal(jax.random.fold_in(key, 10), (E, E), jnp.float32),
        "b_out": 0.02 * jax.random.normal(jax.random.fold_in(key, 11), (1, E), jnp.float32),
        "w_mlp": 0.1 * jax.random.normal(jax.random.fold_in(key, 12), (E, M), jnp.float32),
        "b_mlp": 0.02 * jax.random.normal(jax.random.fold_in(key, 13), (1, M), jnp.float32),
    }


def reference_jax(x, p, heads):
    B, S, E = x.shape
    D = E // heads

    def ln(v, g, b):
        mu = jnp.mean(v, axis=-1, keepdims=True)
        var = jnp.mean((v - mu) ** 2, axis=-1, keepdims=True)
        return (v - mu) / jnp.sqrt(var + 1e-6) * g + b

    xl = ln(x, p["ln1_g"], p["ln1_b"])
    qkv = xl @ p["w_qkv"] + p["b_qkv"]
    q, k, v = qkv[..., :E], qkv[..., E:2 * E], qkv[..., 2 * E:]
    q = q.reshape(B, S, heads, D).transpose(0, 2, 1, 3) / jnp.sqrt(jnp.float32(D))
    k = k.reshape(B, S, heads, D).transpose(0, 2, 1, 3)
    v = v.reshape(B, S, heads, D).transpose(0, 2, 1, 3)
    s = jnp.einsum("bhqd,bhkd->bhqk", q, k)
    pattn = jax.nn.softmax(s, axis=-1)
    o = jnp.einsum("bhqk,bhkd->bhqd", pattn, v).transpose(0, 2, 1, 3).reshape(B, S, E)
    o = o @ p["w_out"] + p["b_out"]
    xr = o + x
    y = ln(xr, p["ln2_g"], p["ln2_b"]) @ p["w_mlp"] + p["b_mlp"]
    return xr + y


if __name__ == "__main__":
    B, S, E, HEADS = 2, 8, 32, 4
    MLP = E  # residual x + y requires mlp_dim == embed_dim

    key = jax.random.PRNGKey(0)
    kx, kp = jax.random.split(key)
    x = jax.random.normal(kx, (B, S, E), jnp.float32)
    params = make_params(kp, E, MLP)

    out = jax.block_until_ready(self_attention_block(x, params, HEADS))
    ref = jax.block_until_ready(reference_jax(x, params, HEADS))

    assert out.shape == (B, S, E)
    # bf16 matmul operands (f32 accumulation) -> tolerance loosened accordingly.
    assert jnp.allclose(out, ref, atol=5e-2, rtol=5e-2), "mismatch vs JAX reference"

    print("KERNEL_OK")
</pallas_src>

<mosaic_0001>
module attributes {stable_mosaic.version = 11 : i64} {
  func.func @ln_qkv_kernel(%arg0: i32, %arg1: i32, %arg2: memref<1x8x32xf32, #tpu.memory_space<vmem>>, %arg3: memref<1x32xf32, #tpu.memory_space<vmem>>, %arg4: memref<1x32xf32, #tpu.memory_space<vmem>>, %arg5: memref<32x96xbf16, #tpu.memory_space<vmem>>, %arg6: memref<1x96xf32, #tpu.memory_space<vmem>>, %arg7: memref<1x8x32xbf16, #tpu.memory_space<vmem>>, %arg8: memref<1x8x32xbf16, #tpu.memory_space<vmem>>, %arg9: memref<1x8x32xbf16, #tpu.memory_space<vmem>>) attributes {dimension_semantics = [#tpu.dimension_semantics<parallel>, #tpu.dimension_semantics<parallel>], iteration_bounds = array<i64: 2, 1>, scalar_prefetch = 0 : i64, scratch_operands = 0 : i64, tpu.core_type = #tpu.core_type<tc>, window_params = [{transform_indices = @transform_0, window_bounds = array<i64: 1, 8, 32>}, {pipeline_mode = #tpu.pipeline_mode<synchronous>, transform_indices = @transform_1, window_bounds = array<i64: 1, 32>}, {pipeline_mode = #tpu.pipeline_mode<synchronous>, transform_indices = @transform_2, window_bounds = array<i64: 1, 32>}, {pipeline_mode = #tpu.pipeline_mode<synchronous>, transform_indices = @transform_3, window_bounds = array<i64: 32, 96>}, {pipeline_mode = #tpu.pipeline_mode<synchronous>, transform_indices = @transform_4, window_bounds = array<i64: 1, 96>}, {transform_indices = @transform_5, window_bounds = array<i64: 1, 8, 32>}, {transform_indices = @transform_6, window_bounds = array<i64: 1, 8, 32>}, {transform_indices = @transform_7, window_bounds = array<i64: 1, 8, 32>}]} {
    %c0 = arith.constant 0 : index
    %c0_0 = arith.constant 0 : index
    %c0_1 = arith.constant 0 : index
    %0 = vector.load %arg2[%c0, %c0_0, %c0_1] : memref<1x8x32xf32, #tpu.memory_space<vmem>>, vector<1x8x32xf32>
    %1 = vector.shape_cast %0 : vector<1x8x32xf32> to vector<8x32xf32>
    %c0_2 = arith.constant 0 : index
    %c0_3 = arith.constant 0 : index
    %2 = vector.load %arg3[%c0_2, %c0_3] : memref<1x32xf32, #tpu.memory_space<vmem>>, vector<1x32xf32>
    %c0_4 = arith.constant 0 : index
    %c0_5 = arith.constant 0 : index
    %3 = vector.load %arg4[%c0_4, %c0_5] : memref<1x32xf32, #tpu.memory_space<vmem>>, vector<1x32xf32>
    %cst = arith.constant dense<0.000000e+00> : vector<8xf32>
    %4 = vector.multi_reduction <add>, %1, %cst [1] : vector<8x32xf32> to vector<8xf32>
    %5 = vector.shape_cast %4 : vector<8xf32> to vector<8x1xf32>
    %cst_6 = arith.constant 3.200000e+01 : f32
    %6 = vector.broadcast %cst_6 : f32 to vector<8x1xf32>
    %7 = arith.divf %5, %6 : vector<8x1xf32>
    %8 = vector.broadcast %7 : vector<8x1xf32> to vector<8x32xf32>
    %9 = arith.subf %1, %8 : vector<8x32xf32>
    %10 = arith.mulf %9, %9 : vector<8x32xf32>
    %cst_7 = arith.constant dense<0.000000e+00> : vector<8xf32>
    %11 = vector.multi_reduction <add>, %10, %cst_7 [1] : vector<8x32xf32> to vector<8xf32>
    %12 = vector.shape_cast %11 : vector<8xf32> to vector<8x1xf32>
    %cst_8 = arith.constant 3.200000e+01 : f32
    %13 = vector.broadcast %cst_8 : f32 to vector<8x1xf32>
    %14 = arith.divf %12, %13 : vector<8x1xf32>
    %cst_9 = arith.constant 9.99999997E-7 : f32
    %15 = vector.broadcast %cst_9 : f32 to vector<8x1xf32>
    %16 = arith.addf %14, %15 : vector<8x1xf32>
    %17 = math.rsqrt %16 : vector<8x1xf32>
    %18 = vector.broadcast %17 : vector<8x1xf32> to vector<8x32xf32>
    %19 = arith.mulf %9, %18 : vector<8x32xf32>
    %20 = vector.broadcast %2 : vector<1x32xf32> to vector<8x32xf32>
    %21 = arith.mulf %19, %20 : vector<8x32xf32>
    %22 = vector.broadcast %3 : vector<1x32xf32> to vector<8x32xf32>
    %23 = arith.addf %21, %22 : vector<8x32xf32>
    %24 = arith.truncf %23 : vector<8x32xf32> to vector<8x32xbf16>
    %c0_10 = arith.constant 0 : index
    %c0_11 = arith.constant 0 : index
    %25 = vector.load %arg5[%c0_10, %c0_11] : memref<32x96xbf16, #tpu.memory_space<vmem>>, vector<32x96xbf16>
    %cst_12 = arith.constant dense<0.000000e+00> : vector<8x96xf32>
    %26 = tpu.matmul %24, %25, %cst_12 {dimension_numbers = #tpu.dot_dimension_numbers<[1], [0], [0], [1], [0, 0, 1, 1], [], []>} : vector<8x32xbf16>, vector<32x96xbf16>, vector<8x96xf32> -> vector<8x96xf32>
    %c0_13 = arith.constant 0 : index
    %c0_14 = arith.constant 0 : index
    %27 = vector.load %arg6[%c0_13, %c0_14] : memref<1x96xf32, #tpu.memory_space<vmem>>, vector<1x96xf32>
    %28 = vector.broadcast %27 : vector<1x96xf32> to vector<8x96xf32>
    %29 = arith.addf %26, %28 : vector<8x96xf32>
    %30 = vector.extract_strided_slice %29 {offsets = [0, 0], sizes = [8, 32], strides = [1, 1]} : vector<8x96xf32> to vector<8x32xf32>
    %cst_15 = arith.constant 0.353553385 : f32
    %31 = vector.broadcast %cst_15 : f32 to vector<8x32xf32>
    %32 = arith.mulf %30, %31 : vector<8x32xf32>
    %33 = arith.truncf %32 : vector<8x32xf32> to vector<8x32xbf16>
    %c0_16 = arith.constant 0 : index
    %c0_17 = arith.constant 0 : index
    %c0_18 = arith.constant 0 : index
    %34 = vector.load %arg7[%c0_16, %c0_17, %c0_18] : memref<1x8x32xbf16, #tpu.memory_space<vmem>>, vector<1x8x32xbf16>
    %35 = vector.shape_cast %34 : vector<1x8x32xbf16> to vector<8x32xbf16>
    %36 = vector.shape_cast %33 : vector<8x32xbf16> to vector<1x8x32xbf16>
    tpu.vector_store %arg7[%c0_16, %c0_17, %c0_18], %36 {strides = array<i32>} : memref<1x8x32xbf16, #tpu.memory_space<vmem>>, vector<1x8x32xbf16>,
    %37 = vector.extract_strided_slice %29 {offsets = [0, 32], sizes = [8, 32], strides = [1, 1]} : vector<8x96xf32> to vector<8x32xf32>
    %38 = arith.truncf %37 : vector<8x32xf32> to vector<8x32xbf16>
    %c0_19 = arith.constant 0 : index
    %c0_20 = arith.constant 0 : index
    %c0_21 = arith.constant 0 : index
    %39 = vector.load %arg8[%c0_19, %c0_20, %c0_21] : memref<1x8x32xbf16, #tpu.memory_space<vmem>>, vector<1x8x32xbf16>
    %40 = vector.shape_cast %39 : vector<1x8x32xbf16> to vector<8x32xbf16>
    %41 = vector.shape_cast %38 : vector<8x32xbf16> to vector<1x8x32xbf16>
    tpu.vector_store %arg8[%c0_19, %c0_20, %c0_21], %41 {strides = array<i32>} : memref<1x8x32xbf16, #tpu.memory_space<vmem>>, vector<1x8x32xbf16>,
    %42 = vector.extract_strided_slice %29 {offsets = [0, 64], sizes = [8, 32], strides = [1, 1]} : vector<8x96xf32> to vector<8x32xf32>
    %43 = arith.truncf %42 : vector<8x32xf32> to vector<8x32xbf16>
    %c0_22 = arith.constant 0 : index
    %c0_23 = arith.constant 0 : index
    %c0_24 = arith.constant 0 : index
    %44 = vector.load %arg9[%c0_22, %c0_23, %c0_24] : memref<1x8x32xbf16, #tpu.memory_space<vmem>>, vector<1x8x32xbf16>
    %45 = vector.shape_cast %44 : vector<1x8x32xbf16> to vector<8x32xbf16>
    %46 = vector.shape_cast %43 : vector<8x32xbf16> to vector<1x8x32xbf16>
    tpu.vector_store %arg9[%c0_22, %c0_23, %c0_24], %46 {strides = array<i32>} : memref<1x8x32xbf16, #tpu.memory_space<vmem>>, vector<1x8x32xbf16>,
    return
  }
  func.func @transform_0(%arg0: i32, %arg1: i32) -> (i32, i32, i32) {
    %c0_i32 = arith.constant 0 : i32
    %c0_i32_0 = arith.constant 0 : i32
    return %arg0, %arg1, %c0_i32 : i32, i32, i32
  }
  func.func @transform_1(%arg0: i32, %arg1: i32) -> (i32, i32) {
    %c0_i32 = arith.constant 0 : i32
    %c0_i32_0 = arith.constant 0 : i32
    %c0_i32_1 = arith.constant 0 : i32
    return %c0_i32, %c0_i32_0 : i32, i32
  }
  func.func @transform_2(%arg0: i32, %arg1: i32) -> (i32, i32) {
    %c0_i32 = arith.constant 0 : i32
    %c0_i32_0 = arith.constant 0 : i32
    %c0_i32_1 = arith.constant 0 : i32
    return %c0_i32, %c0_i32_0 : i32, i32
  }
  func.func @transform_3(%arg0: i32, %arg1: i32) -> (i32, i32) {
    %c0_i32 = arith.constant 0 : i32
    %c0_i32_0 = arith.constant 0 : i32
    %c0_i32_1 = arith.constant 0 : i32
    return %c0_i32, %c0_i32_0 : i32, i32
  }
  func.func @transform_4(%arg0: i32, %arg1: i32) -> (i32, i32) {
    %c0_i32 = arith.constant 0 : i32
    %c0_i32_0 = arith.constant 0 : i32
    %c0_i32_1 = arith.constant 0 : i32
    return %c0_i32, %c0_i32_0 : i32, i32
  }
  func.func @transform_5(%arg0: i32, %arg1: i32) -> (i32, i32, i32) {
    %c0_i32 = arith.constant 0 : i32
    %c0_i32_0 = arith.constant 0 : i32
    return %arg0, %arg1, %c0_i32 : i32, i32, i32
  }
  func.func @transform_6(%arg0: i32, %arg1: i32) -> (i32, i32, i32) {
    %c0_i32 = arith.constant 0 : i32
    %c0_i32_0 = arith.constant 0 : i32
    return %arg0, %arg1, %c0_i32 : i32, i32, i32
  }
  func.func @transform_7(%arg0: i32, %arg1: i32) -> (i32, i32, i32) {
    %c0_i32 = arith.constant 0 : i32
    %c0_i32_0 = arith.constant 0 : i32
    return %arg0, %arg1, %c0_i32 : i32, i32, i32
  }
}

</mosaic_0001>

<llo_original>
// kernel: tpu_custom_call.1
$region0: #{tpu_custom_call.1}
  #allocation0 [shape = 'u32[]', space=smem, size = 0x4, offset = 0x4, fixed_abs, tag = 'smem constant byte address 0x4 - core index']
  #allocation1 [shape = 'u32[144,128]{1,0:T(1,128)}', space=vmem, size = 0x12000, scoped, tag = 'internal scratch']
  %s0 = inlined_call_operand.hbm [shape: f32[2,8,32], index: 0, kind: input, shape index: {}]
  %s1 = inlined_call_operand.vmem [shape: f32[1,32], index: 1, kind: input, shape index: {}]
  %s2 = inlined_call_operand.vmem [shape: f32[1,32], index: 2, kind: input, shape index: {}]
  %s3 = inlined_call_operand.hbm [shape: bf16[32,96], index: 3, kind: input, shape index: {}]
  %s4 = inlined_call_operand.vmem [shape: f32[1,96], index: 4, kind: input, shape index: {}]
  %s5 = inlined_call_operand.hbm [shape: bf16[2,8,32], index: 5, kind: output, shape index: {0}]
  %s6 = inlined_call_operand.hbm [shape: bf16[2,8,32], index: 6, kind: output, shape index: {1}]
  %s7 = inlined_call_operand.hbm [shape: bf16[2,8,32], index: 7, kind: output, shape index: {2}]
  %8 = xla_tuple %s5, %s6, %s7
  %s9 = sld [smem:[#allocation0]]
  $region77: #{tpu_custom_call.1} parent=0
    _
  %s11 = ssub.s32 1, %s9
  %s12 = scalar_select 0, %s11, %s9
  $region1: #{tpu_custom_call.1} parent=0
    #allocation2 [shape = 'u8[8192]{0}', space=vmem, size = 0x2000, scoped, tag = 'input window, operand 0']
    #allocation3 [shape = 's32[2]{0}', space=sflag, size = 0x8, scoped, tag = 'scoped memory for tpu_custom_call.1']
    #allocation4 [shape = 's32[2]{0}', space=sflag, size = 0x8, scoped, tag = 'scoped memory for tpu_custom_call.1']
    #allocation5 [shape = 'u8[8192]{0}', space=vmem, size = 0x2000, scoped, tag = 'input window, operand 3, single buffered']
    #allocation6 [shape = 's32[1]{0}', space=sflag, size = 0x4, scoped, tag = 'scoped memory for tpu_custom_call.1']
    #allocation7 [shape = 'u8[4096]{0}', space=vmem, size = 0x1000, scoped, tag = 'output window, operand 0']
    #allocation8 [shape = 'u8[4096]{0}', space=vmem, size = 0x1000, scoped, tag = 'output window, operand 1']
    #allocation9 [shape = 's32[2]{0}', space=sflag, size = 0x8, scoped, tag = 'scoped memory for tpu_custom_call.1']
    #allocation10 [shape = 'u8[4096]{0}', space=vmem, size = 0x1000, scoped, tag = 'output window, operand 2']
    %13 = vsyncpa [#allocation3], 0
    %s14 = scalar_lea.sflag [#allocation3], 1
    %15 = vsyncpa %s14, 0
    %16 = vsyncpa [#allocation6], 0
    %17 = vsyncpa [#allocation4], 0
    %s18 = scalar_lea.sflag [#allocation4], 1
    %19 = vsyncpa %s18, 0
    %20 = vsyncpa [#allocation9], 0
    %s21 = scalar_lea.sflag [#allocation9], 1
    %22 = vsyncpa %s21, 0
    loop: start=0, step=1, limit=4
    $region2: #{tpu_custom_call.1} parent=1 // loop_pre_header
      _
    $region3: #{tpu_custom_call.1} parent=1 // loop_header
      %s24 = sphi 0, %s28
      %p25 = scmp.ge.s32.totalorder %s24, 4
      %s31 = sphi 0, %s43
      %s32 = sphi 0, %s39
      %s33 = sphi 0, %s31
      %s34 = sphi 0, %s32
      %s35 = sphi 0, %s33
      %s36 = sphi 0, %s34
      %s48 = sphi 0, %s50
      %s51 = sphi 0, %s48
      %s52 = sphi 0, %s51
      %s68 = sphi 0, %s52
      %s72 = sphi 0, %s72
      %s74 = sphi 0, %s72
      %s75 = sphi 0, %s74
      %s89 = sphi 0, %s75
      %s93 = sphi 0, %s93
      %s95 = sphi 0, %s93
      %s96 = sphi 0, %s95
      %s110 = sphi 0, %s96
      %s114 = sphi 0, %s114
      %s116 = sphi 0, %s114
      %s117 = sphi 0, %s116
      %s131 = sphi 0, %s117
      %s135 = sphi 0, %s135
      %s137 = sphi 0, %s135
      %s138 = sphi 0, %s137
      %s152 = sphi 0, %s138
      %s160 = sphi 0, %s162
      %s163 = sphi 0, %s160
      %s164 = sphi 0, %s163
      %s180 = sphi 0, %s164
      %s188 = sphi 0, %s190
      %s191 = sphi 0, %s188
      %s192 = sphi 0, %s191
      %s208 = sphi 0, %s192
      %s216 = sphi 0, %s218
      %s219 = sphi 0, %s216
      %s220 = sphi 0, %s219
      %s236 = sphi 0, %s220
    $region4: #{tpu_custom_call.1} parent=1 // loop_header_branch
      %27 = sbr.rel (%p25) target = $region8
    $region5: #{tpu_custom_call.1} parent=1 // loop_body
      %s29 = ssub.s32 %s24, 1
      %s30 = ssub.s32 %s24, 2
      %s37 = sadd.s32 1, %s32
      %p38 = scmp.ge.s32.totalorder %s37, 1
      %s39 = scalar_select %p38, 0, %s37
      %s40 = sadd.s32 1, %s31
      %s41 = scalar_select %p38, %s40, %s31
      %p42 = scmp.ge.s32.totalorder %s41, 2
      %s43 = scalar_select %p42, 0, %s41
      %s44 = ssub.s32 %s31, %s43
      %s45 = ssub.s32 %s32, %s39
      %s46 = sor.u32 %s44, %s45
      %p47 = scmp.eq.s32.totalorder %s46, 0
      %s49 = sadd.s32 %s48, 1
      %s50 = scalar_select %p47, %s48, %s49
      %p53 = pneg %p47
      %p54 = scmp.eq.s32.totalorder %s24, 1
      %p55 = por %p53, %p54
      %p56 = scmp.ne.s32.totalorder %s48, %s51
      %p57 = scmp.eq.s32.totalorder %s24, 0
      %p58 = por %p56, %p57
      %p59 = scmp.ne.s32.totalorder %s48, %s51
      %p60 = scmp.eq.s32.totalorder %s29, 1
      %p61 = por %p59, %p60
      %p62 = scmp.ne.s32.totalorder %s51, %s52
      %p63 = scmp.eq.s32.totalorder %s29, 0
      %p64 = por %p62, %p63
      %p65 = scmp.ne.s32.totalorder %s51, %s52
      %p66 = scmp.eq.s32.totalorder %s30, 1
      %p67 = por %p65, %p66
      %p69 = scmp.ne.s32.totalorder %s52, %s68
      %p70 = scmp.eq.s32.totalorder %s30, 0
      %p71 = por %p69, %p70
      %s73 = sadd.s32 %s72, 1
      %p76 = scmp.eq.s32.totalorder %s24, 1
      %p77 = scmp.ne.s32.totalorder %s72, %s74
      %p78 = scmp.eq.s32.totalorder %s24, 0
      %p79 = por %p77, %p78
      %p80 = scmp.ne.s32.totalorder %s72, %s74
      %p81 = scmp.eq.s32.totalorder %s29, 1
      %p82 = por %p80, %p81
      %p83 = scmp.ne.s32.totalorder %s74, %s75
      %p84 = scmp.eq.s32.totalorder %s29, 0
      %p85 = por %p83, %p84
      %p86 = scmp.ne.s32.totalorder %s74, %s75
      %p87 = scmp.eq.s32.totalorder %s30, 1
      %p88 = por %p86, %p87
      %p90 = scmp.ne.s32.totalorder %s75, %s89
      %p91 = scmp.eq.s32.totalorder %s30, 0
      %p92 = por %p90, %p91
      %s94 = sadd.s32 %s93, 1
      %p97 = scmp.eq.s32.totalorder %s24, 1
      %p98 = scmp.ne.s32.totalorder %s93, %s95
      %p99 = scmp.eq.s32.totalorder %s24, 0
      %p100 = por %p98, %p99
      %p101 = scmp.ne.s32.totalorder %s93, %s95
      %p102 = scmp.eq.s32.totalorder %s29, 1
      %p103 = por %p101, %p102
      %p104 = scmp.ne.s32.totalorder %s95, %s96
      %p105 = scmp.eq.s32.totalorder %s29, 0
      %p106 = por %p104, %p105
      %p107 = scmp.ne.s32.totalorder %s95, %s96
      %p108 = scmp.eq.s32.totalorder %s30, 1
      %p109 = por %p107, %p108
      %p111 = scmp.ne.s32.totalorder %s96, %s110
      %p112 = scmp.eq.s32.totalorder %s30, 0
      %p113 = por %p111, %p112
      %s115 = sadd.s32 %s114, 1
      %p118 = scmp.eq.s32.totalorder %s24, 1
      %p119 = scmp.ne.s32.totalorder %s114, %s116
      %p120 = scmp.eq.s32.totalorder %s24, 0
      %p121 = por %p119, %p120
      %p122 = scmp.ne.s32.totalorder %s114, %s116
      %p123 = scmp.eq.s32.totalorder %s29, 1
      %p124 = por %p122, %p123
      %p125 = scmp.ne.s32.totalorder %s116, %s117
      %p126 = scmp.eq.s32.totalorder %s29, 0
      %p127 = por %p125, %p126
      %p128 = scmp.ne.s32.totalorder %s116, %s117
      %p129 = scmp.eq.s32.totalorder %s30, 1
      %p130 = por %p128, %p129
      %p132 = scmp.ne.s32.totalorder %s117, %s131
      %p133 = scmp.eq.s32.totalorder %s30, 0
      %p134 = por %p132, %p133
      %s136 = sadd.s32 %s135, 1
      %p139 = scmp.eq.s32.totalorder %s24, 1
      %p140 = scmp.ne.s32.totalorder %s135, %s137
      %p141 = scmp.eq.s32.totalorder %s24, 0
      %p142 = por %p140, %p141
      %p143 = scmp.ne.s32.totalorder %s135, %s137
      %p144 = scmp.eq.s32.totalorder %s29, 1
      %p145 = por %p143, %p144
      %p146 = scmp.ne.s32.totalorder %s137, %s138
      %p147 = scmp.eq.s32.totalorder %s29, 0
      %p148 = por %p146, %p147
      %p149 = scmp.ne.s32.totalorder %s137, %s138
      %p150 = scmp.eq.s32.totalorder %s30, 1
      %p151 = por %p149, %p150
      %p153 = scmp.ne.s32.totalorder %s138, %s152
      %p154 = scmp.eq.s32.totalorder %s30, 0
      %p155 = por %p153, %p154
      %s156 = ssub.s32 %s31, %s43
      %s157 = ssub.s32 %s32, %s39
      %s158 = sor.u32 %s156, %s157
      %p159 = scmp.eq.s32.totalorder %s158, 0
      %s161 = sadd.s32 %s160, 1
      %s162 = scalar_select %p159, %s160, %s161
      %p165 = pneg %p159
      %p166 = scmp.eq.s32.totalorder %s24, 1
      %p167 = por %p165, %p166
      %p168 = scmp.ne.s32.totalorder %s160, %s163
      %p169 = scmp.eq.s32.totalorder %s24, 0
      %p170 = por %p168, %p169
      %p171 = scmp.ne.s32.totalorder %s160, %s163
      %p172 = scmp.eq.s32.totalorder %s29, 1
      %p173 = por %p171, %p172
      %p174 = scmp.ne.s32.totalorder %s163, %s164
      %p175 = scmp.eq.s32.totalorder %s29, 0
      %p176 = por %p174, %p175
      %p177 = scmp.ne.s32.totalorder %s163, %s164
      %p178 = scmp.eq.s32.totalorder %s30, 1
      %p179 = por %p177, %p178
      %p181 = scmp.ne.s32.totalorder %s164, %s180
      %p182 = scmp.eq.s32.totalorder %s30, 0
      %p183 = por %p181, %p182
      %s184 = ssub.s32 %s31, %s43
      %s185 = ssub.s32 %s32, %s39
      %s186 = sor.u32 %s184, %s185
      %p187 = scmp.eq.s32.totalorder %s186, 0
      %s189 = sadd.s32 %s188, 1
      %s190 = scalar_select %p187, %s188, %s189
      %p193 = pneg %p187
      %p194 = scmp.eq.s32.totalorder %s24, 1
      %p195 = por %p193, %p194
      %p196 = scmp.ne.s32.totalorder %s188, %s191
      %p197 = scmp.eq.s32.totalorder %s24, 0
      %p198 = por %p196, %p197
      %p199 = scmp.ne.s32.totalorder %s188, %s191
      %p200 = scmp.eq.s32.totalorder %s29, 1
      %p201 = por %p199, %p200
      %p202 = scmp.ne.s32.totalorder %s191, %s192
      %p203 = scmp.eq.s32.totalorder %s29, 0
      %p204 = por %p202, %p203
      %p205 = scmp.ne.s32.totalorder %s191, %s192
      %p206 = scmp.eq.s32.totalorder %s30, 1
      %p207 = por %p205, %p206
      %p209 = scmp.ne.s32.totalorder %s192, %s208
      %p210 = scmp.eq.s32.totalorder %s30, 0
      %p211 = por %p209, %p210
      %s212 = ssub.s32 %s31, %s43
      %s213 = ssub.s32 %s32, %s39
      %s214 = sor.u32 %s212, %s213
      %p215 = scmp.eq.s32.totalorder %s214, 0
      %s217 = sadd.s32 %s216, 1
      %s218 = scalar_select %p215, %s216, %s217
      %p221 = pneg %p215
      %p222 = scmp.eq.s32.totalorder %s24, 1
      %p223 = por %p221, %p222
      %p224 = scmp.ne.s32.totalorder %s216, %s219
      %p225 = scmp.eq.s32.totalorder %s24, 0
      %p226 = por %p224, %p225
      %p227 = scmp.ne.s32.totalorder %s216, %s219
      %p228 = scmp.eq.s32.totalorder %s29, 1
      %p229 = por %p227, %p228
      %p230 = scmp.ne.s32.totalorder %s219, %s220
      %p231 = scmp.eq.s32.totalorder %s29, 0
      %p232 = por %p230, %p231
      %p233 = scmp.ne.s32.totalorder %s219, %s220
      %p234 = scmp.eq.s32.totalorder %s30, 1
      %p235 = por %p233, %p234
      %p237 = scmp.ne.s32.totalorder %s220, %s236
      %p238 = scmp.eq.s32.totalorder %s30, 0
      %p239 = por %p237, %p238
      %p240 = scmp.le.s32.totalorder 1, %s24
      %p241 = scmp.lt.s32.totalorder %s24, 3
      %p242 = pnand %p240, %p241
      %p243 = pneg %p242
      // Predicated region
      $region9: #{tpu_custom_call.1} parent=5 // pred_check
        _
      $region10: #{tpu_custom_call.1} parent=5 // pred_check_branch
        %245 = sbr.rel (%p242) target = $region12
      $region11: #{tpu_custom_call.1} parent=5 // pred_region
        %s246 = ssub.s32 %s24, 1
        // Predicated region
        $region13: #{tpu_custom_call.1} parent=11 // pred_check
          %p247 = pneg %p85
        $region14: #{tpu_custom_call.1} parent=11 // pred_check_branch
          %249 = sbr.rel (%p247) target = $region16
        $region15: #{tpu_custom_call.1} parent=11 // pred_region
          _
        $region16: #{tpu_custom_call.1} parent=11 // pred_fallthru
          _
        // Predicated region
        $region17: #{tpu_custom_call.1} parent=11 // pred_check
          %p250 = pneg %p106
        $region18: #{tpu_custom_call.1} parent=11 // pred_check_branch
          %252 = sbr.rel (%p250) target = $region20
        $region19: #{tpu_custom_call.1} parent=11 // pred_region
          _
        $region20: #{tpu_custom_call.1} parent=11 // pred_fallthru
          _
        // Predicated region
        $region21: #{tpu_custom_call.1} parent=11 // pred_check
          %p253 = pneg %p127
        $region22: #{tpu_custom_call.1} parent=11 // pred_check_branch
          %255 = sbr.rel (%p253) target = $region24
        $region23: #{tpu_custom_call.1} parent=11 // pred_region
          %s257 = ssub.s32 256, 256
          %258 = vsyncadd [#allocation6], %s257
          %s259 = sshll.u32 [#allocation5], 4
          %s260 = int_to_ptr.vmem [resolvable:$true] %s259
          %265 = dma.hbm_to_vmem [thread:$0]  %s3, 256, %s260, [#allocation6], 64, 64, 4
        $region24: #{tpu_custom_call.1} parent=11 // pred_fallthru
          _
        // Predicated region
        $region25: #{tpu_custom_call.1} parent=11 // pred_check
          %p266 = pneg %p148
        $region26: #{tpu_custom_call.1} parent=11 // pred_check_branch
          %268 = sbr.rel (%p266) target = $region28
        $region27: #{tpu_custom_call.1} parent=11 // pred_region
          _
        $region28: #{tpu_custom_call.1} parent=11 // pred_fallthru
          _
      $region12: #{tpu_custom_call.1} parent=5 // pred_fallthru
        _
      %p269 = scmp.lt.s32.totalorder %s24, 2
      // Predicated region
      $region29: #{tpu_custom_call.1} parent=5 // pred_check
        %p270 = pneg %p269
      $region30: #{tpu_custom_call.1} parent=5 // pred_check_branch
        %272 = sbr.rel (%p270) target = $region32
      $region31: #{tpu_custom_call.1} parent=5 // pred_region
        // Predicated region
        $region33: #{tpu_custom_call.1} parent=31 // pred_check
          %p273 = pneg %p58
        $region34: #{tpu_custom_call.1} parent=31 // pred_check_branch
          %275 = sbr.rel (%p273) target = $region36
        $region35: #{tpu_custom_call.1} parent=31 // pred_region
          %s276 = sand.u32 %s48, 1
          %s277 = scalar_lea.sflag [#allocation3], %s276
          %s278 = sand.u32 %s48, 1
          %s279 = smul.addr %s278, 8
          %s280 = scalar_lea.vmem [#allocation2], %s279
          %s282 = ssub.s32 128, 128
          %283 = vsyncadd %s277, %s282
          %s284 = sadd.s32 %s32, %s31
          %s285 = smul.addr %s284, 128
          %s286 = scalar_lea.hbm %s0, %s285
          %s288 = sshll.u32 %s280, 4
          %s289 = int_to_ptr.vmem [resolvable:$true] %s288
          %291 = dma.hbm_to_vmem [thread:$0]  %s286, 128, %s289, %s277
        $region36: #{tpu_custom_call.1} parent=31 // pred_fallthru
          _
      $region32: #{tpu_custom_call.1} parent=5 // pred_fallthru
        _
      %p292 = scmp.le.s32.totalorder 1, %s24
      %p293 = scmp.lt.s32.totalorder %s24, 3
      %p294 = pnand %p292, %p293
      %p295 = pneg %p294
      // Predicated region
      $region37: #{tpu_custom_call.1} parent=5 // pred_check
        _
      $region38: #{tpu_custom_call.1} parent=5 // pred_check_branch
        %297 = sbr.rel (%p294) target = $region40
      $region39: #{tpu_custom_call.1} parent=5 // pred_region
        %s298 = ssub.s32 %s24, 1
        %s299 = sand.u32 %s51, 1
        %s300 = scalar_lea.sflag [#allocation3], %s299
        %s301 = sand.u32 %s51, 1
        %s302 = smul.addr %s301, 8
        %s303 = scalar_lea.vmem [#allocation2], %s302
        // Predicated region
        $region41: #{tpu_custom_call.1} parent=39 // pred_check
          %p304 = pneg %p64
        $region42: #{tpu_custom_call.1} parent=39 // pred_check_branch
          %306 = sbr.rel (%p304) target = $region44
        $region43: #{tpu_custom_call.1} parent=39 // pred_region
          %307 = dma.done %s300, 128
        $region44: #{tpu_custom_call.1} parent=39 // pred_fallthru
          _
        // Predicated region
        $region45: #{tpu_custom_call.1} parent=39 // pred_check
          %p308 = pneg %p127
        $region46: #{tpu_custom_call.1} parent=39 // pred_check_branch
          %310 = sbr.rel (%p308) target = $region48
        $region47: #{tpu_custom_call.1} parent=39 // pred_region
          %311 = dma.done [#allocation6], 256
        $region48: #{tpu_custom_call.1} parent=39 // pred_fallthru
          _
        %s312 = sand.u32 %s51, 1
        %s313 = scalar_lea.sflag [#allocation3], %s312
        %s314 = sand.u32 %s51, 1
        %s315 = smul.addr %s314, 8
        %s316 = scalar_lea.vmem [#allocation2], %s315
        %p317 = pneg %p64
        %p318 = pneg %p61
        %p319 = pneg %p85
        %p320 = pneg %p82
        %p321 = pneg %p106
        %p322 = pneg %p103
        %p323 = pneg %p127
        %p324 = pneg %p124
        %p325 = pneg %p148
        %p326 = pneg %p145
        %p327 = pneg %p176
        %p328 = pneg %p173
        %s329 = sand.u32 %s163, 1
        %s330 = scalar_lea.sflag [#allocation4], %s329
        %s331 = sand.u32 %s163, 1
        %s332 = smul.addr %s331, 4
        %s333 = scalar_lea.vmem [#allocation7], %s332
        %p334 = pneg %p204
        %p335 = pneg %p201
        %s336 = sand.u32 %s29, 1
        %s337 = scalar_lea.sflag [#allocation9], %s336
        %s338 = sand.u32 %s191, 1
        %s339 = smul.addr %s338, 4
        %s340 = scalar_lea.vmem [#allocation8], %s339
        %p341 = pneg %p232
        %p342 = pneg %p229
        %s343 = sand.u32 %s29, 1
        %s344 = scalar_lea.sflag [#allocation9], %s343
        %s345 = sand.u32 %s219, 1
        %s346 = smul.addr %s345, 4
        %s347 = scalar_lea.vmem [#allocation10], %s346
        %v349 = vld [vmem:[%s303] sm:$0xff]
        %v350 = vld [vmem:[%s1] sm:$0x1]
        %v351 = vld [vmem:[%s2] sm:$0x1]
        %vm352 = vcmask 261120
        %v353 = vsel %vm352, %v349, 0.0
        %354 = vadd.xlane.f32.xlu0 %v353
        %v355 = vpop.xlane.xlu0 %354
        %v356 = vrcp.pop 32.0
        %v357 = vmul.f32 %v355, %v356
        %v358 = vsub.f32 %v349, %v357
        %v359 = vmul.f32 %v358, %v358
        %v360 = vsel %vm352, %v359, 0.0
        %361 = vadd.xlane.f32.xlu0 %v360
        %v362 = vpop.xlane.xlu0 %361
        %v363 = vmul.f32 %v362, %v356
        %v364 = vadd.f32 %v363, 1e-06
        %v365 = vrsqrt.pop %v364
        %v366 = vmul.f32 %v358, %v365
        %v368 = vlaneseq
        %v369 = vshrl.u32 %v368, 7
        %v370 = vsub.s32 0, %v369
        %v371 = vrot.slane %v350, %v370
        %v373 = vmul.f32 %v366, %v371
        %v375 = vlaneseq
        %v376 = vshrl.u32 %v375, 7
        %v377 = vsub.s32 0, %v376
        %v378 = vrot.slane %v351, %v377
        %v380 = vadd.f32 %v373, %v378
        %v381 = vpack.c.bf16 %v380, %v380
        %v382 = vld [vmem:[#allocation5] sm:$0xf]
        %v383 = vld [vmem:[#allocation5 + $0x4] sm:$0xf]
        %v384 = vld [vmem:[#allocation5 + $0x8] sm:$0xf]
        %v385 = vld [vmem:[#allocation5 + $0xc] sm:$0xf]
        %v386 = vld [vmem:[%s4] sm:$0x1]
        %v388 = vlaneseq
        %v389 = vshrl.u32 %v388, 7
        %v390 = vsub.s32 0, %v389
        %v391 = vrot.slane %v386, %v390
        %v397 = vunpack.c.l.b16 %v382
        %v398 = vunpack.c.l.b16 %v383
        %v399 = vunpack.c.l.b16 %v384
        %v400 = vunpack.c.l.b16 %v385
        %v401 = vpack.c.b16 %v398, %v397
        %v402 = vpack.c.b16 %v400, %v399
        %v406 = vsel %vm352, %v381, 0
        %408 = vmatprep.subr.bf16.mxu0 0
        %409 = vmatpush1.bf16.msra.mxu0 %v401
        %410 = vmatprep.subr.bf16.mxu0 0
        %411 = vmatpush1.bf16.msra.mxu0 %v402
        %412 = vmatprep.subr.bf16.mxu0 0
        %413 = vmatpush1.bf16.msra.mxu0 0
        %414 = vmatprep.subr.bf16.mxu0 0
        %415 = vmatpush1.bf16.msra.mxu0 0
        %416 = vmatprep.subr.bf16.mxu0 0
        %417 = vmatpush1.bf16.msra.mxu0 0
        %418 = vmatprep.subr.bf16.mxu0 0
        %419 = vmatpush1.bf16.msra.mxu0 0
        %420 = vmatprep.subr.bf16.mxu0 0
        %421 = vmatpush1.bf16.msra.mxu0 0
        %422 = vmatprep.subr.bf16.mxu0 0
        %423 = vmatpush1.bf16.msra.mxu0 0
        %424 = vmatprep.subr.bf16.mxu0 0
        %425 = vmatpush1.bf16.msra.mxu0 0
        %426 = vmatprep.subr.bf16.mxu0 0
        %427 = vmatpush1.bf16.msra.mxu0 0
        %428 = vmatprep.subr.bf16.mxu0 0
        %429 = vmatpush1.bf16.msra.mxu0 0
        %430 = vmatprep.subr.bf16.mxu0 0
        %431 = vmatpush1.bf16.msra.mxu0 0
        %432 = vmatprep.subr.bf16.mxu0 0
        %433 = vmatpush1.bf16.msra.mxu0 0
        %434 = vmatprep.subr.bf16.mxu0 0
        %435 = vmatpush1.bf16.msra.mxu0 0
        %436 = vmatprep.subr.bf16.mxu0 0
        %437 = vmatpush1.bf16.msra.mxu0 0
        %438 = vmatprep.subr.bf16.mxu0 0
        %439 = vmatpush1.bf16.msra.mxu0 0
        %440 = vmatprep.mubr.bf16.mxu0 0
        %441 = vmatmul.mubr.bf16.gmra.mrb[0].mxu0 %v406
        %v442 = vpop.f32.mrb[0].mxu0
        %v443 = vadd.f32 %v391, %v442
        %v444 = vpop.f32.mrb[0].mxu0
        %v445 = vpop.f32.mrb[0].mxu0
        %v446 = vpop.f32.mrb[0].mxu0
        %447 = vdwg.mxu0
        %v448 = vmul.f32 %v443, 0.35355338
        %v449 = vpack.c.bf16 %v448, %v448
        %vm450 = vcmask 257024
        %451 = vst.msk [vmem:[%s333] sm:$0xf] %vm450, %v449
        %v452 = vpack.c.bf16 %v443, %v443
        %v454 = vunpack.c.l.b16 %v452
        %v455 = vpack.c.b16 %v454, %v454
        %456 = vrot.lane.b32.xlu0 %v455, 96
        %v457 = vpop.permute.xlu0 %456
        %459 = vst.msk [vmem:[%s340] sm:$0xf] %vm450, %v457
        %460 = vrot.lane.b32.xlu0 %v455, 64
        %v461 = vpop.permute.xlu0 %460
        %463 = vst.msk [vmem:[%s347] sm:$0xf] %vm450, %v461
        %s464 = sand.u32 %s163, 1
        %s465 = scalar_lea.sflag [#allocation4], %s464
        %s466 = sand.u32 %s163, 1
        %s467 = smul.addr %s466, 4
        %s468 = scalar_lea.vmem [#allocation7], %s467
        %s469 = sand.u32 %s29, 1
        %s470 = scalar_lea.sflag [#allocation9], %s469
        %s471 = sand.u32 %s191, 1
        %s472 = smul.addr %s471, 4
        %s473 = scalar_lea.vmem [#allocation8], %s472
        %s474 = sand.u32 %s29, 1
        %s475 = scalar_lea.sflag [#allocation9], %s474
        %s476 = sand.u32 %s219, 1
        %s477 = smul.addr %s476, 4
        %s478 = scalar_lea.vmem [#allocation10], %s477
        // Predicated region
        $region49: #{tpu_custom_call.1} parent=39 // pred_check
          %p479 = pneg %p173
        $region50: #{tpu_custom_call.1} parent=39 // pred_check_branch
          %481 = sbr.rel (%p479) target = $region52
        $region51: #{tpu_custom_call.1} parent=39 // pred_region
          %s483 = ssub.s32 64, 64
          %484 = vsyncadd %s465, %s483
          %s485 = sadd.s32 %s34, %s33
          %s486 = smul.addr %s485, 64
          %s487 = scalar_lea.hbm %s5, %s486
          %s489 = sshll.u32 %s468, 4
          %s490 = int_to_ptr.vmem [resolvable:$true] %s489
          %492 = dma.vmem_to_hbm [thread:$0]  %s490, 64, %s487, %s465
        $region52: #{tpu_custom_call.1} parent=39 // pred_fallthru
          _
        // Predicated region
        $region53: #{tpu_custom_call.1} parent=39 // pred_check
          %p493 = pneg %p201
        $region54: #{tpu_custom_call.1} parent=39 // pred_check_branch
          %495 = sbr.rel (%p493) target = $region56
        $region55: #{tpu_custom_call.1} parent=39 // pred_region
          %s497 = ssub.s32 64, 64
          %498 = vsyncadd %s470, %s497
          %s499 = sadd.s32 %s34, %s33
          %s500 = smul.addr %s499, 64
          %s501 = scalar_lea.hbm %s6, %s500
          %s503 = sshll.u32 %s473, 4
          %s504 = int_to_ptr.vmem [resolvable:$true] %s503
          %506 = dma.vmem_to_hbm [thread:$0]  %s504, 64, %s501, %s470
        $region56: #{tpu_custom_call.1} parent=39 // pred_fallthru
          _
        // Predicated region
        $region57: #{tpu_custom_call.1} parent=39 // pred_check
          %p507 = pneg %p229
        $region58: #{tpu_custom_call.1} parent=39 // pred_check_branch
          %509 = sbr.rel (%p507) target = $region60
        $region59: #{tpu_custom_call.1} parent=39 // pred_region
          %s511 = ssub.s32 64, 64
          %512 = vsyncadd %s475, %s511
          %s513 = sadd.s32 %s34, %s33
          %s514 = smul.addr %s513, 64
          %s515 = scalar_lea.hbm %s7, %s514
          %s517 = sshll.u32 %s478, 4
          %s518 = int_to_ptr.vmem [resolvable:$true] %s517
          %520 = dma.vmem_to_hbm [thread:$0]  %s518, 64, %s515, %s475
        $region60: #{tpu_custom_call.1} parent=39 // pred_fallthru
          _
      $region40: #{tpu_custom_call.1} parent=5 // pred_fallthru
        _
      %p521 = scmp.le.s32.totalorder 2, %s24
      // Predicated region
      $region61: #{tpu_custom_call.1} parent=5 // pred_check
        %p522 = pneg %p521
      $region62: #{tpu_custom_call.1} parent=5 // pred_check_branch
        %524 = sbr.rel (%p522) target = $region64
      $region63: #{tpu_custom_call.1} parent=5 // pred_region
        %s525 = ssub.s32 %s24, 2
        // Predicated region
        $region65: #{tpu_custom_call.1} parent=63 // pred_check
          %p526 = pneg %p179
        $region66: #{tpu_custom_call.1} parent=63 // pred_check_branch
          %528 = sbr.rel (%p526) target = $region68
        $region67: #{tpu_custom_call.1} parent=63 // pred_region
          %s529 = sand.u32 %s164, 1
          %s530 = scalar_lea.sflag [#allocation4], %s529
          %s531 = sand.u32 %s164, 1
          %s532 = smul.addr %s531, 4
          %s533 = scalar_lea.vmem [#allocation7], %s532
          %534 = dma.done %s530, 64
        $region68: #{tpu_custom_call.1} parent=63 // pred_fallthru
          _
        // Predicated region
        $region69: #{tpu_custom_call.1} parent=63 // pred_check
          %p535 = pneg %p207
        $region70: #{tpu_custom_call.1} parent=63 // pred_check_branch
          %537 = sbr.rel (%p535) target = $region72
        $region71: #{tpu_custom_call.1} parent=63 // pred_region
          %s538 = sand.u32 %s30, 1
          %s539 = scalar_lea.sflag [#allocation9], %s538
          %s540 = sand.u32 %s192, 1
          %s541 = smul.addr %s540, 4
          %s542 = scalar_lea.vmem [#allocation8], %s541
          %543 = dma.done %s539, 64
        $region72: #{tpu_custom_call.1} parent=63 // pred_fallthru
          _
        // Predicated region
        $region73: #{tpu_custom_call.1} parent=63 // pred_check
          %p544 = pneg %p235
        $region74: #{tpu_custom_call.1} parent=63 // pred_check_branch
          %546 = sbr.rel (%p544) target = $region76
        $region75: #{tpu_custom_call.1} parent=63 // pred_region
          %s547 = sand.u32 %s30, 1
          %s548 = scalar_lea.sflag [#allocation9], %s547
          %s549 = sand.u32 %s220, 1
          %s550 = smul.addr %s549, 4
          %s551 = scalar_lea.vmem [#allocation10], %s550
          %552 = dma.done %s548, 64
        $region76: #{tpu_custom_call.1} parent=63 // pred_fallthru
          _
      $region64: #{tpu_custom_call.1} parent=5 // pred_fallthru
        _
    $region6: #{tpu_custom_call.1} parent=1 // loop_footer
      %s28 = sadd.s32 1, %s24
    $region7: #{tpu_custom_call.1} parent=1 // loop_footer_branch
      %23 = sbr.rel target = $region3
    $region8: #{tpu_custom_call.1} parent=1 // loop_exit
      _
    %553 = vsyncpa [#allocation3], 1
    %s554 = scalar_lea.sflag [#allocation3], 1
    %555 = vsyncpa %s554, 1
    %556 = vsyncpa [#allocation6], 1
    %557 = vsyncpa [#allocation4], 1
    %s558 = scalar_lea.sflag [#allocation4], 1
    %559 = vsyncpa %s558, 1
    %560 = vsyncpa [#allocation9], 1
    %s561 = scalar_lea.sflag [#allocation9], 1
    %562 = vsyncpa %s561, 1

</llo_original>
